<compile_context>
chip_gen: v7x
topology: tpu7x:2x2x1
jax: 0.10.0
libtpu: 0.0.40
codegen_flags: <defaults>
</compile_context>

<pallas_src>
import functools

import jax
import jax.numpy as jnp
from jax.experimental import pallas as pl
from jax.experimental.pallas import tpu as pltpu


def ffn_kernel(x_ref, w1_ref, b1_ref, w2_ref, b2_ref, w3_ref, b3_ref,
               o_ref, acc_ref):
    """One (row-tile, d_ff-slab) step of the SwiGLU FFN with f32 accumulation."""
    ff = pl.program_id(1)

    @pl.when(ff == 0)
    def _():
        acc_ref[...] = jnp.zeros_like(acc_ref)

    x = x_ref[...]                                                    # (tm, d_model)

    # Gate / linear branches for this d_ff slab (MXU, f32 accumulation).
    h1 = jnp.dot(x, w1_ref[...], preferred_element_type=jnp.float32) + b1_ref[...]
    h2 = jnp.dot(x, w2_ref[...], preferred_element_type=jnp.float32) + b2_ref[...]

    # SiLU gate in f32 (exp -> EUP, mul -> VPU), then down-project the slab and accumulate.
    gated = (h1 * jax.nn.sigmoid(h1)) * h2                            # (tm, tn_ff) f32
    acc_ref[...] += jnp.dot(gated.astype(w3_ref.dtype), w3_ref[...],
                            preferred_element_type=jnp.float32)

    @pl.when(ff == pl.num_programs(1) - 1)
    def _():
        # b3 and the final cast happen exactly once, in the epilogue.
        o_ref[...] = (acc_ref[...] + b3_ref[...]).astype(o_ref.dtype)


def _round_up(x, m):
    return ((x + m - 1) // m) * m


@functools.partial(jax.jit, static_argnames=("tm", "max_ff_tile", "compute_dtype"))
def feed_forward(x, w1, b1, w2, b2, w3, b3, *,
                 tm=256, max_ff_tile=1024, compute_dtype=None):
    """x: (batch, seq, d_model) -> (batch, seq, d_model).

    Weights are stored pre-transposed as (in_features, out_features) so the kernel
    computes plain x @ W (== PyTorch nn.Linear's x @ W.T).
    """
    batch, seq, d_model = x.shape
    d_ff = w1.shape[1]
    M = batch * seq

    cdt = jnp.dtype(x.dtype) if compute_dtype is None else jnp.dtype(compute_dtype)

    x2d = x.reshape(M, d_model).astype(cdt)
    w1c = w1.astype(cdt)
    w2c = w2.astype(cdt)
    w3c = w3.astype(cdt)
    # Biases stay f32: they are added to the f32 MXU accumulations.
    b1_2d = b1.reshape(1, d_ff).astype(jnp.float32)
    b2_2d = b2.reshape(1, d_ff).astype(jnp.float32)
    b3_2d = b3.reshape(1, d_model).astype(jnp.float32)

    # ---- row (M) tiling: large tm, rounded to a multiple of 16, M padded (no dropped rows) ----
    tm_eff = min(_round_up(tm, 16), _round_up(M, 16))
    M_pad = _round_up(M, tm_eff)
    if M_pad != M:
        x2d = jnp.pad(x2d, ((0, M_pad - M), (0, 0)))

    # ---- d_ff tiling (grid reduction axis); slab width is a multiple of 128 or full d_ff ----
    if d_ff <= max_ff_tile:
        tn_ff = d_ff
        ff_pad = d_ff
    else:
        tn_ff = max(128, (max_ff_tile // 128) * 128)
        ff_pad = _round_up(d_ff, tn_ff)
    if ff_pad != d_ff:
        pad = ff_pad - d_ff
        w1c = jnp.pad(w1c, ((0, 0), (0, pad)))
        w2c = jnp.pad(w2c, ((0, 0), (0, pad)))
        w3c = jnp.pad(w3c, ((0, pad), (0, 0)))
        b1_2d = jnp.pad(b1_2d, ((0, 0), (0, pad)))
        b2_2d = jnp.pad(b2_2d, ((0, 0), (0, pad)))

    grid = (M_pad // tm_eff, ff_pad // tn_ff)

    # ---- explicit VMEM budget for the chosen tiles (2x for double-buffered I/O) ----
    act_bytes = cdt.itemsize
    out_bytes = jnp.dtype(x.dtype).itemsize
    x_tile = tm_eff * d_model * act_bytes
    w_tiles = (2 * d_model * tn_ff + tn_ff * d_model) * act_bytes
    b_tiles = (2 * tn_ff + d_model) * 4
    out_tile = tm_eff * d_model * out_bytes
    acc_tile = tm_eff * d_model * 4
    vmem_limit = 2 * (x_tile + w_tiles + b_tiles + out_tile) + acc_tile
    vmem_limit = min(int(vmem_limit * 1.25) + (2 << 20), 100 * 1024 * 1024)

    out2d = pl.pallas_call(
        ffn_kernel,
        out_shape=jax.ShapeDtypeStruct((M_pad, d_model), x.dtype),
        grid_spec=pltpu.PrefetchScalarGridSpec(
            num_scalar_prefetch=0,
            grid=grid,
            in_specs=[
                pl.BlockSpec((tm_eff, d_model), lambda i, f: (i, 0)),   # x row tile
                pl.BlockSpec((d_model, tn_ff), lambda i, f: (0, f)),    # W1 column slab
                pl.BlockSpec((1, tn_ff), lambda i, f: (0, f)),          # b1 slab
                pl.BlockSpec((d_model, tn_ff), lambda i, f: (0, f)),    # W2 column slab
                pl.BlockSpec((1, tn_ff), lambda i, f: (0, f)),          # b2 slab
                pl.BlockSpec((tn_ff, d_model), lambda i, f: (f, 0)),    # W3 row slab
                pl.BlockSpec((1, d_model), lambda i, f: (0, 0)),        # b3
            ],
            out_specs=pl.BlockSpec((tm_eff, d_model), lambda i, f: (i, 0)),
            scratch_shapes=[pltpu.VMEM((tm_eff, d_model), jnp.float32)],
        ),
        compiler_params=pltpu.CompilerParams(
            dimension_semantics=("parallel", "arbitrary"),
            vmem_limit_bytes=vmem_limit,
        ),
    )(x2d, w1c, b1_2d, w2c, b2_2d, w3c, b3_2d)

    return out2d[:M].reshape(batch, seq, d_model)


def init_params(key, d_model, d_ff, dtype=jnp.float32):
    """Matches nn.Linear's U(-1/sqrt(fan_in), +1/sqrt(fan_in)) init.
    Weights are stored transposed: (in_features, out_features)."""
    k = jax.random.split(key, 6)

    def lin(kw, kb, fan_in, fan_out):
        bound = 1.0 / jnp.sqrt(fan_in)
        w = jax.random.uniform(kw, (fan_in, fan_out), dtype, -bound, bound)
        b = jax.random.uniform(kb, (fan_out,), dtype, -bound, bound)
        return w, b

    w1, b1 = lin(k[0], k[1], d_model, d_ff)
    w2, b2 = lin(k[2], k[3], d_model, d_ff)
    w3, b3 = lin(k[4], k[5], d_ff, d_model)
    return w1, b1, w2, b2, w3, b3


if __name__ == "__main__":
    key = jax.random.PRNGKey(0)
    k_x, k_p, k_x2, k_p2 = jax.random.split(key, 4)

    # ---- test 1: small f32 problem (single grid step on both axes) ----
    batch, seq, d_model, d_ff = 2, 8, 32, 64
    x = jax.random.normal(k_x, (batch, seq, d_model), jnp.float32)
    params = init_params(k_p, d_model, d_ff)
    out = feed_forward(x, *params)
    jax.block_until_ready(out)

    w1, b1, w2, b2, w3, b3 = params
    h = jax.nn.silu(x @ w1 + b1) * (x @ w2 + b2)
    ref = h @ w3 + b3
    assert out.shape == (batch, seq, d_model)
    assert jnp.allclose(out, ref, atol=1e-5, rtol=1e-5)

    # ---- test 2: M not a multiple of the row tile + d_ff reduction over 3 slabs ----
    batch2, seq2, d_model2, d_ff2 = 2, 5, 128, 384
    x2 = jax.random.normal(k_x2, (batch2, seq2, d_model2), jnp.float32)
    params2 = init_params(k_p2, d_model2, d_ff2)
    out2 = feed_forward(x2, *params2, max_ff_tile=128)
    jax.block_until_ready(out2)

    w1b, b1b, w2b, b2b, w3b, b3b = params2
    h2 = jax.nn.silu(x2 @ w1b + b1b) * (x2 @ w2b + b2b)
    ref2 = h2 @ w3b + b3b
    assert out2.shape == (batch2, seq2, d_model2)
    assert jnp.allclose(out2, ref2, atol=1e-4, rtol=1e-4)

    # ---- test 3: bf16 compute path (bf16 MXU operands, f32 gate + accumulation) ----
    out_bf16 = feed_forward(x, *params, compute_dtype=jnp.bfloat16)
    jax.block_until_ready(out_bf16)

    xb = x.astype(jnp.bfloat16).astype(jnp.float32)
    w1f, w2f, w3f = (w.astype(jnp.bfloat16).astype(jnp.float32) for w in (w1, w2, w3))
    hb = jax.nn.silu(xb @ w1f + b1) * (xb @ w2f + b2)
    refb = hb @ w3f + b3
    assert jnp.allclose(out_bf16, refb, atol=5e-2, rtol=5e-2)

    print("KERNEL_OK")
</pallas_src>

<mosaic_0001>
module attributes {stable_mosaic.version = 11 : i64} {
  func.func @ffn_kernel(%arg0: i32, %arg1: i32, %arg2: memref<16x32xf32, #tpu.memory_space<vmem>>, %arg3: memref<32x64xf32, #tpu.memory_space<vmem>>, %arg4: memref<1x64xf32, #tpu.memory_space<vmem>>, %arg5: memref<32x64xf32, #tpu.memory_space<vmem>>, %arg6: memref<1x64xf32, #tpu.memory_space<vmem>>, %arg7: memref<64x32xf32, #tpu.memory_space<vmem>>, %arg8: memref<1x32xf32, #tpu.memory_space<vmem>>, %arg9: memref<16x32xf32, #tpu.memory_space<vmem>>, %arg10: memref<16x32xf32, #tpu.memory_space<vmem>>) attributes {dimension_semantics = [#tpu.dimension_semantics<parallel>, #tpu.dimension_semantics<arbitrary>], iteration_bounds = array<i64: 1, 1>, scalar_prefetch = 0 : i64, scratch_operands = 1 : i64, tpu.core_type = #tpu.core_type<tc>, window_params = [{transform_indices = @transform_0, window_bounds = array<i64: 16, 32>}, {transform_indices = @transform_1, window_bounds = array<i64: 32, 64>}, {transform_indices = @transform_2, window_bounds = array<i64: 1, 64>}, {transform_indices = @transform_3, window_bounds = array<i64: 32, 64>}, {transform_indices = @transform_4, window_bounds = array<i64: 1, 64>}, {transform_indices = @transform_5, window_bounds = array<i64: 64, 32>}, {pipeline_mode = #tpu.pipeline_mode<synchronous>, transform_indices = @transform_6, window_bounds = array<i64: 1, 32>}, {transform_indices = @transform_7, window_bounds = array<i64: 16, 32>}]} {
    %c0_i32 = arith.constant 0 : i32
    %0 = arith.cmpi eq, %arg1, %c0_i32 : i32
    %1 = arith.extui %0 : i1 to i32
    %c0_i32_0 = arith.constant 0 : i32
    %2 = arith.cmpi ne, %1, %c0_i32_0 : i32
    scf.if %2 {
      %cst_21 = arith.constant 0.000000e+00 : f32
      %29 = vector.broadcast %cst_21 : f32 to vector<16x32xf32>
      %c0_22 = arith.constant 0 : index
      %c0_23 = arith.constant 0 : index
      %30 = vector.load %arg10[%c0_22, %c0_23] : memref<16x32xf32, #tpu.memory_space<vmem>>, vector<16x32xf32>
      tpu.vector_store %arg10[%c0_22, %c0_23], %29 {strides = array<i32>} : memref<16x32xf32, #tpu.memory_space<vmem>>, vector<16x32xf32>,
    } else {
    }
    %c0 = arith.constant 0 : index
    %c0_1 = arith.constant 0 : index
    %3 = vector.load %arg2[%c0, %c0_1] : memref<16x32xf32, #tpu.memory_space<vmem>>, vector<16x32xf32>
    %c0_2 = arith.constant 0 : index
    %c0_3 = arith.constant 0 : index
    %4 = vector.load %arg3[%c0_2, %c0_3] : memref<32x64xf32, #tpu.memory_space<vmem>>, vector<32x64xf32>
    %cst = arith.constant dense<0.000000e+00> : vector<16x64xf32>
    %5 = tpu.matmul %3, %4, %cst {dimension_numbers = #tpu.dot_dimension_numbers<[1], [0], [0], [1], [0, 0, 1, 1], [], []>} : vector<16x32xf32>, vector<32x64xf32>, vector<16x64xf32> -> vector<16x64xf32>
    %c0_4 = arith.constant 0 : index
    %c0_5 = arith.constant 0 : index
    %6 = vector.load %arg4[%c0_4, %c0_5] : memref<1x64xf32, #tpu.memory_space<vmem>>, vector<1x64xf32>
    %7 = vector.broadcast %6 : vector<1x64xf32> to vector<16x64xf32>
    %8 = arith.addf %5, %7 : vector<16x64xf32>
    %c0_6 = arith.constant 0 : index
    %c0_7 = arith.constant 0 : index
    %9 = vector.load %arg5[%c0_6, %c0_7] : memref<32x64xf32, #tpu.memory_space<vmem>>, vector<32x64xf32>
    %cst_8 = arith.constant dense<0.000000e+00> : vector<16x64xf32>
    %10 = tpu.matmul %3, %9, %cst_8 {dimension_numbers = #tpu.dot_dimension_numbers<[1], [0], [0], [1], [0, 0, 1, 1], [], []>} : vector<16x32xf32>, vector<32x64xf32>, vector<16x64xf32> -> vector<16x64xf32>
    %c0_9 = arith.constant 0 : index
    %c0_10 = arith.constant 0 : index
    %11 = vector.load %arg6[%c0_9, %c0_10] : memref<1x64xf32, #tpu.memory_space<vmem>>, vector<1x64xf32>
    %12 = vector.broadcast %11 : vector<1x64xf32> to vector<16x64xf32>
    %13 = arith.addf %10, %12 : vector<16x64xf32>
    %14 = arith.negf %8 : vector<16x64xf32>
    %15 = math.exp %14 : vector<16x64xf32>
    %cst_11 = arith.constant 1.000000e+00 : f32
    %16 = vector.broadcast %cst_11 : f32 to vector<16x64xf32>
    %17 = arith.addf %16, %15 : vector<16x64xf32>
    %18 = arith.divf %16, %17 : vector<16x64xf32>
    %19 = arith.mulf %8, %18 : vector<16x64xf32>
    %20 = arith.mulf %19, %13 : vector<16x64xf32>
    %c0_12 = arith.constant 0 : index
    %c0_13 = arith.constant 0 : index
    %21 = vector.load %arg10[%c0_12, %c0_13] : memref<16x32xf32, #tpu.memory_space<vmem>>, vector<16x32xf32>
    %c0_14 = arith.constant 0 : index
    %c0_15 = arith.constant 0 : index
    %22 = vector.load %arg7[%c0_14, %c0_15] : memref<64x32xf32, #tpu.memory_space<vmem>>, vector<64x32xf32>
    %cst_16 = arith.constant dense<0.000000e+00> : vector<16x32xf32>
    %23 = tpu.matmul %20, %22, %cst_16 {dimension_numbers = #tpu.dot_dimension_numbers<[1], [0], [0], [1], [0, 0, 1, 1], [], []>} : vector<16x64xf32>, vector<64x32xf32>, vector<16x32xf32> -> vector<16x32xf32>
    %24 = arith.addf %21, %23 : vector<16x32xf32>
    %c0_17 = arith.constant 0 : index
    %c0_18 = arith.constant 0 : index
    %25 = vector.load %arg10[%c0_17, %c0_18] : memref<16x32xf32, #tpu.memory_space<vmem>>, vector<16x32xf32>
    tpu.vector_store %arg10[%c0_17, %c0_18], %24 {strides = array<i32>} : memref<16x32xf32, #tpu.memory_space<vmem>>, vector<16x32xf32>,
    %c0_i32_19 = arith.constant 0 : i32
    %26 = arith.cmpi eq, %arg1, %c0_i32_19 : i32
    %27 = arith.extui %26 : i1 to i32
    %c0_i32_20 = arith.constant 0 : i32
    %28 = arith.cmpi ne, %27, %c0_i32_20 : i32
    scf.if %28 {
      %c0_21 = arith.constant 0 : index
      %c0_22 = arith.constant 0 : index
      %29 = vector.load %arg10[%c0_21, %c0_22] : memref<16x32xf32, #tpu.memory_space<vmem>>, vector<16x32xf32>
      %c0_23 = arith.constant 0 : index
      %c0_24 = arith.constant 0 : index
      %30 = vector.load %arg8[%c0_23, %c0_24] : memref<1x32xf32, #tpu.memory_space<vmem>>, vector<1x32xf32>
      %31 = vector.broadcast %30 : vector<1x32xf32> to vector<16x32xf32>
      %32 = arith.addf %29, %31 : vector<16x32xf32>
      %c0_25 = arith.constant 0 : index
      %c0_26 = arith.constant 0 : index
      %33 = vector.load %arg9[%c0_25, %c0_26] : memref<16x32xf32, #tpu.memory_space<vmem>>, vector<16x32xf32>
      tpu.vector_store %arg9[%c0_25, %c0_26], %32 {strides = array<i32>} : memref<16x32xf32, #tpu.memory_space<vmem>>, vector<16x32xf32>,
    } else {
    }
    return
  }
  func.func @transform_0(%arg0: i32, %arg1: i32) -> (i32, i32) {
    %c0_i32 = arith.constant 0 : i32
    %c0_i32_0 = arith.constant 0 : i32
    return %arg0, %c0_i32 : i32, i32
  }
  func.func @transform_1(%arg0: i32, %arg1: i32) -> (i32, i32) {
    %c0_i32 = arith.constant 0 : i32
    %c0_i32_0 = arith.constant 0 : i32
    return %c0_i32, %arg1 : i32, i32
  }
  func.func @transform_2(%arg0: i32, %arg1: i32) -> (i32, i32) {
    %c0_i32 = arith.constant 0 : i32
    %c0_i32_0 = arith.constant 0 : i32
    return %c0_i32, %arg1 : i32, i32
  }
  func.func @transform_3(%arg0: i32, %arg1: i32) -> (i32, i32) {
    %c0_i32 = arith.constant 0 : i32
    %c0_i32_0 = arith.constant 0 : i32
    return %c0_i32, %arg1 : i32, i32
  }
  func.func @transform_4(%arg0: i32, %arg1: i32) -> (i32, i32) {
    %c0_i32 = arith.constant 0 : i32
    %c0_i32_0 = arith.constant 0 : i32
    return %c0_i32, %arg1 : i32, i32
  }
  func.func @transform_5(%arg0: i32, %arg1: i32) -> (i32, i32) {
    %c0_i32 = arith.constant 0 : i32
    %c0_i32_0 = arith.constant 0 : i32
    return %arg1, %c0_i32 : i32, i32
  }
  func.func @transform_6(%arg0: i32, %arg1: i32) -> (i32, i32) {
    %c0_i32 = arith.constant 0 : i32
    %c0_i32_0 = arith.constant 0 : i32
    %c0_i32_1 = arith.constant 0 : i32
    return %c0_i32, %c0_i32_0 : i32, i32
  }
  func.func @transform_7(%arg0: i32, %arg1: i32) -> (i32, i32) {
    %c0_i32 = arith.constant 0 : i32
    %c0_i32_0 = arith.constant 0 : i32
    return %arg0, %c0_i32 : i32, i32
  }
}

</mosaic_0001>

<llo_original>
// kernel: feed_forward.1
$region0: #{feed_forward.1}
  #allocation0 [shape = 'u32[]', space=smem, size = 0x4, offset = 0x4, fixed_abs, tag = 'smem constant byte address 0x4 - core index']
  #allocation1 [shape = 'u32[144,128]{1,0:T(1,128)}', space=vmem, size = 0x12000, scoped, tag = 'internal scratch']
  #allocation2 [shape = 'f32[16,32]{1,0:T(8,128)}', space=vmem, size = 0x2000, scoped, tag = 'scratch operand']
  %s0 = inlined_call_operand.vmem [shape: f32[16,32], index: 0, kind: input, shape index: {}]
  %s1 = inlined_call_operand.vmem [shape: f32[32,64], index: 1, kind: input, shape index: {}]
  %s2 = inlined_call_operand.vmem [shape: f32[1,64], index: 2, kind: input, shape index: {}]
  %s3 = inlined_call_operand.vmem [shape: f32[32,64], index: 3, kind: input, shape index: {}]
  %s4 = inlined_call_operand.vmem [shape: f32[1,64], index: 4, kind: input, shape index: {}]
  %s5 = inlined_call_operand.vmem [shape: f32[64,32], index: 5, kind: input, shape index: {}]
  %s6 = inlined_call_operand.vmem [shape: f32[1,32], index: 6, kind: input, shape index: {}]
  %s7 = inlined_call_operand.hbm [shape: f32[16,32], index: 7, kind: output, shape index: {}]
  %s8 = sld [smem:[#allocation0]]
  $region46: #{feed_forward.1} parent=0
    _
  %s10 = ssub.s32 1, %s8
  %s11 = scalar_select 0, %s10, %s8
  $region1: #{feed_forward.1} parent=0
    #allocation3 [shape = 'u8[8192]{0}', space=vmem, size = 0x2000, scoped, tag = 'output window, operand 0, single buffered']
    #allocation4 [shape = 's32[1]{0}', space=sflag, size = 0x4, scoped, tag = 'scoped memory for feed_forward.1']
    %12 = vsyncpa [#allocation4], 0
    // Predicated region
    $region2: #{feed_forward.1} parent=1 // pred_check
      _
    $region3: #{feed_forward.1} parent=1 // pred_check_branch
      %14 = sbr.rel (0) target = $region5
    $region4: #{feed_forward.1} parent=1 // pred_region
      _
    $region5: #{feed_forward.1} parent=1 // pred_fallthru
      _
    // Predicated region
    $region6: #{feed_forward.1} parent=1 // pred_check
      _
    $region7: #{feed_forward.1} parent=1 // pred_check_branch
      %16 = sbr.rel (0) target = $region9
    $region8: #{feed_forward.1} parent=1 // pred_region
      _
    $region9: #{feed_forward.1} parent=1 // pred_fallthru
      _
    // Predicated region
    $region10: #{feed_forward.1} parent=1 // pred_check
      _
    $region11: #{feed_forward.1} parent=1 // pred_check_branch
      %18 = sbr.rel (0) target = $region13
    $region12: #{feed_forward.1} parent=1 // pred_region
      _
    $region13: #{feed_forward.1} parent=1 // pred_fallthru
      _
    // Predicated region
    $region14: #{feed_forward.1} parent=1 // pred_check
      _
    $region15: #{feed_forward.1} parent=1 // pred_check_branch
      %20 = sbr.rel (0) target = $region17
    $region16: #{feed_forward.1} parent=1 // pred_region
      _
    $region17: #{feed_forward.1} parent=1 // pred_fallthru
      _
    // Predicated region
    $region18: #{feed_forward.1} parent=1 // pred_check
      _
    $region19: #{feed_forward.1} parent=1 // pred_check_branch
      %22 = sbr.rel (0) target = $region21
    $region20: #{feed_forward.1} parent=1 // pred_region
      _
    $region21: #{feed_forward.1} parent=1 // pred_fallthru
      _
    // Predicated region
    $region22: #{feed_forward.1} parent=1 // pred_check
      _
    $region23: #{feed_forward.1} parent=1 // pred_check_branch
      %24 = sbr.rel (0) target = $region25
    $region24: #{feed_forward.1} parent=1 // pred_region
      _
    $region25: #{feed_forward.1} parent=1 // pred_fallthru
      _
    // Predicated region
    $region26: #{feed_forward.1} parent=1 // pred_check
      _
    $region27: #{feed_forward.1} parent=1 // pred_check_branch
      %26 = sbr.rel (0) target = $region29
    $region28: #{feed_forward.1} parent=1 // pred_region
      _
    $region29: #{feed_forward.1} parent=1 // pred_fallthru
      _
    %p27 = scmp.eq.s32.totalorder 0, 0
    // Predicated region
    $region30: #{feed_forward.1} parent=1 // pred_check
      %p28 = pneg %p27
    $region31: #{feed_forward.1} parent=1 // pred_check_branch
      %30 = sbr.rel (%p28) target = $region33
    $region32: #{feed_forward.1} parent=1 // pred_region
      %vm31 = vcmask 261120
      %32 = vst.msk [vmem:[#allocation2] sm:$0xff] %vm31, 0.0
      %33 = vst.msk [vmem:[#allocation2 + $0x8] sm:$0xff] %vm31, 0.0
    $region33: #{feed_forward.1} parent=1 // pred_fallthru
      _
    %v34 = vld [vmem:[%s0] sm:$0xff]
    %v35 = vld [vmem:[%s0 + $0x8] sm:$0xff]
    %v36 = vld [vmem:[%s1] sm:$0xff]
    %v37 = vld [vmem:[%s1 + $0x8] sm:$0xff]
    %v38 = vld [vmem:[%s1 + $0x10] sm:$0xff]
    %v39 = vld [vmem:[%s1 + $0x18] sm:$0xff]
    %v40 = vld [vmem:[%s2] sm:$0x1]
    %v42 = vlaneseq
    %v43 = vshrl.u32 %v42, 7
    %v44 = vsub.s32 0, %v43
    %v45 = vrot.slane %v40, %v44
    %vm47 = vcmask 261120
    %v49 = vsel %vm47, %v34, 0
    %v52 = vsel %vm47, %v35, 0
    %54 = vmatprep.subr.mxu0 0.0
    %55 = vmatpush1.msra.mxu0 %v36
    %56 = vmatprep.subr.mxu0 0.0
    %57 = vmatpush1.msra.mxu0 %v37
    %58 = vmatprep.subr.mxu0 0.0
    %59 = vmatpush1.msra.mxu0 %v38
    %60 = vmatprep.subr.mxu0 0.0
    %61 = vmatpush1.msra.mxu0 %v39
    %62 = vmatprep.subr.mxu0 0.0
    %63 = vmatpush1.msra.mxu0 0.0
    %64 = vmatprep.subr.mxu0 0.0
    %65 = vmatpush1.msra.mxu0 0.0
    %66 = vmatprep.subr.mxu0 0.0
    %67 = vmatpush1.msra.mxu0 0.0
    %68 = vmatprep.subr.mxu0 0.0
    %69 = vmatpush1.msra.mxu0 0.0
    %70 = vmatprep.subr.mxu0 0.0
    %71 = vmatpush1.msra.mxu0 0.0
    %72 = vmatprep.subr.mxu0 0.0
    %73 = vmatpush1.msra.mxu0 0.0
    %74 = vmatprep.subr.mxu0 0.0
    %75 = vmatpush1.msra.mxu0 0.0
    %76 = vmatprep.subr.mxu0 0.0
    %77 = vmatpush1.msra.mxu0 0.0
    %78 = vmatprep.subr.mxu0 0.0
    %79 = vmatpush1.msra.mxu0 0.0
    %80 = vmatprep.subr.mxu0 0.0
    %81 = vmatpush1.msra.mxu0 0.0
    %82 = vmatprep.subr.mxu0 0.0
    %83 = vmatpush1.msra.mxu0 0.0
    %84 = vmatprep.subr.mxu0 0.0
    %85 = vmatpush1.msra.mxu0 0.0
    %86 = vmatprep.subr.mxu0 0.0
    %87 = vmatpush1.msra.mxu0 0.0
    %88 = vmatprep.subr.mxu0 0.0
    %89 = vmatpush1.msra.mxu0 0.0
    %90 = vmatprep.subr.mxu0 0.0
    %91 = vmatpush1.msra.mxu0 0.0
    %92 = vmatprep.subr.mxu0 0.0
    %93 = vmatpush1.msra.mxu0 0.0
    %94 = vmatprep.subr.mxu0 0.0
    %95 = vmatpush1.msra.mxu0 0.0
    %96 = vmatprep.subr.mxu0 0.0
    %97 = vmatpush1.msra.mxu0 0.0
    %98 = vmatprep.subr.mxu0 0.0
    %99 = vmatpush1.msra.mxu0 0.0
    %100 = vmatprep.subr.mxu0 0.0
    %101 = vmatpush1.msra.mxu0 0.0
    %102 = vmatprep.subr.mxu0 0.0
    %103 = vmatpush1.msra.mxu0 0.0
    %104 = vmatprep.subr.mxu0 0.0
    %105 = vmatpush1.msra.mxu0 0.0
    %106 = vmatprep.subr.mxu0 0.0
    %107 = vmatpush1.msra.mxu0 0.0
    %108 = vmatprep.subr.mxu0 0.0
    %109 = vmatpush1.msra.mxu0 0.0
    %110 = vmatprep.subr.mxu0 0.0
    %111 = vmatpush1.msra.mxu0 0.0
    %112 = vmatprep.subr.mxu0 0.0
    %113 = vmatpush1.msra.mxu0 0.0
    %114 = vmatprep.subr.mxu0 0.0
    %115 = vmatpush1.msra.mxu0 0.0
    %116 = vmatprep.subr.mxu0 0.0
    %117 = vmatpush1.msra.mxu0 0.0
    %118 = vmatprep.mubr.f32.mxu0 0.0
    %119 = vmatmul.mubr.f32.gmra.mrb[0].mxu0 %v49
    %v120 = vpop.f32.mrb[0].mxu0
    %v121 = vadd.f32 %v45, %v120
    %v122 = vpop.f32.mrb[0].mxu0
    %123 = vmatprep.mubr.f32.mxu0 0.0
    %124 = vmatmul.mubr.f32.gmra.mrb[0].mxu0 %v52
    %v125 = vpop.f32.mrb[0].mxu0
    %v126 = vadd.f32 %v45, %v125
    %v127 = vpop.f32.mrb[0].mxu0
    %128 = vdwg.mxu0
    %v129 = vld [vmem:[%s3] sm:$0xff]
    %v130 = vld [vmem:[%s3 + $0x8] sm:$0xff]
    %v131 = vld [vmem:[%s3 + $0x10] sm:$0xff]
    %v132 = vld [vmem:[%s3 + $0x18] sm:$0xff]
    %v133 = vld [vmem:[%s4] sm:$0x1]
    %v135 = vlaneseq
    %v136 = vshrl.u32 %v135, 7
    %v137 = vsub.s32 0, %v136
    %v138 = vrot.slane %v133, %v137
    %140 = vmatprep.subr.mxu0 0.0
    %141 = vmatpush1.msra.mxu0 %v129
    %142 = vmatprep.subr.mxu0 0.0
    %143 = vmatpush1.msra.mxu0 %v130
    %144 = vmatprep.subr.mxu0 0.0
    %145 = vmatpush1.msra.mxu0 %v131
    %146 = vmatprep.subr.mxu0 0.0
    %147 = vmatpush1.msra.mxu0 %v132
    %148 = vmatprep.subr.mxu0 0.0
    %149 = vmatpush1.msra.mxu0 0.0
    %150 = vmatprep.subr.mxu0 0.0
    %151 = vmatpush1.msra.mxu0 0.0
    %152 = vmatprep.subr.mxu0 0.0
    %153 = vmatpush1.msra.mxu0 0.0
    %154 = vmatprep.subr.mxu0 0.0
    %155 = vmatpush1.msra.mxu0 0.0
    %156 = vmatprep.subr.mxu0 0.0
    %157 = vmatpush1.msra.mxu0 0.0
    %158 = vmatprep.subr.mxu0 0.0
    %159 = vmatpush1.msra.mxu0 0.0
    %160 = vmatprep.subr.mxu0 0.0
    %161 = vmatpush1.msra.mxu0 0.0
    %162 = vmatprep.subr.mxu0 0.0
    %163 = vmatpush1.msra.mxu0 0.0
    %164 = vmatprep.subr.mxu0 0.0
    %165 = vmatpush1.msra.mxu0 0.0
    %166 = vmatprep.subr.mxu0 0.0
    %167 = vmatpush1.msra.mxu0 0.0
    %168 = vmatprep.subr.mxu0 0.0
    %169 = vmatpush1.msra.mxu0 0.0
    %170 = vmatprep.subr.mxu0 0.0
    %171 = vmatpush1.msra.mxu0 0.0
    %172 = vmatprep.subr.mxu0 0.0
    %173 = vmatpush1.msra.mxu0 0.0
    %174 = vmatprep.subr.mxu0 0.0
    %175 = vmatpush1.msra.mxu0 0.0
    %176 = vmatprep.subr.mxu0 0.0
    %177 = vmatpush1.msra.mxu0 0.0
    %178 = vmatprep.subr.mxu0 0.0
    %179 = vmatpush1.msra.mxu0 0.0
    %180 = vmatprep.subr.mxu0 0.0
    %181 = vmatpush1.msra.mxu0 0.0
    %182 = vmatprep.subr.mxu0 0.0
    %183 = vmatpush1.msra.mxu0 0.0
    %184 = vmatprep.subr.mxu0 0.0
    %185 = vmatpush1.msra.mxu0 0.0
    %186 = vmatprep.subr.mxu0 0.0
    %187 = vmatpush1.msra.mxu0 0.0
    %188 = vmatprep.subr.mxu0 0.0
    %189 = vmatpush1.msra.mxu0 0.0
    %190 = vmatprep.subr.mxu0 0.0
    %191 = vmatpush1.msra.mxu0 0.0
    %192 = vmatprep.subr.mxu0 0.0
    %193 = vmatpush1.msra.mxu0 0.0
    %194 = vmatprep.subr.mxu0 0.0
    %195 = vmatpush1.msra.mxu0 0.0
    %196 = vmatprep.subr.mxu0 0.0
    %197 = vmatpush1.msra.mxu0 0.0
    %198 = vmatprep.subr.mxu0 0.0
    %199 = vmatpush1.msra.mxu0 0.0
    %200 = vmatprep.subr.mxu0 0.0
    %201 = vmatpush1.msra.mxu0 0.0
    %202 = vmatprep.subr.mxu0 0.0
    %203 = vmatpush1.msra.mxu0 0.0
    %204 = vmatprep.mubr.f32.mxu0 0.0
    %205 = vmatmul.mubr.f32.gmra.mrb[0].mxu0 %v49
    %v206 = vpop.f32.mrb[0].mxu0
    %v207 = vadd.f32 %v138, %v206
    %v208 = vpop.f32.mrb[0].mxu0
    %209 = vmatprep.mubr.f32.mxu0 0.0
    %210 = vmatmul.mubr.f32.gmra.mrb[0].mxu0 %v52
    %v211 = vpop.f32.mrb[0].mxu0
    %v212 = vadd.f32 %v138, %v211
    %v213 = vpop.f32.mrb[0].mxu0
    %214 = vdwg.mxu0
    %v215 = vxor.u32 %v121, 2147483648
    %v216 = vxor.u32 %v126, 2147483648
    %v217 = vmul.f32 %v215, 1.442695
    %v218 = vpow.pop %v217
    %v219 = vmul.f32 %v216, 1.442695
    %v220 = vpow.pop %v219
    %v221 = vadd.f32 %v218, 1.0
    %v222 = vadd.f32 %v220, 1.0
    %v223 = vrcp.pop %v221
    %v224 = vmul.f32 1.0, %v223
    %v225 = vrcp.pop %v222
    %v226 = vmul.f32 1.0, %v225
    %v227 = vmul.f32 %v121, %v224
    %v228 = vmul.f32 %v126, %v226
    %v229 = vmul.f32 %v227, %v207
    %v230 = vmul.f32 %v228, %v212
    %v231 = vld [vmem:[#allocation2] sm:$0xff]
    %v232 = vld [vmem:[#allocation2 + $0x8] sm:$0xff]
    %v233 = vld [vmem:[%s5] sm:$0xff]
    %v234 = vld [vmem:[%s5 + $0x8] sm:$0xff]
    %v235 = vld [vmem:[%s5 + $0x10] sm:$0xff]
    %v236 = vld [vmem:[%s5 + $0x18] sm:$0xff]
    %v237 = vld [vmem:[%s5 + $0x20] sm:$0xff]
    %v238 = vld [vmem:[%s5 + $0x28] sm:$0xff]
    %v239 = vld [vmem:[%s5 + $0x30] sm:$0xff]
    %v240 = vld [vmem:[%s5 + $0x38] sm:$0xff]
    %vm241 = vcmask 523264
    %v243 = vsel %vm241, %v229, 0
    %v246 = vsel %vm241, %v230, 0
    %248 = vmatprep.subr.mxu0 0.0
    %249 = vmatpush1.msra.mxu0 %v233
    %250 = vmatprep.subr.mxu0 0.0
    %251 = vmatpush1.msra.mxu0 %v234
    %252 = vmatprep.subr.mxu0 0.0
    %253 = vmatpush1.msra.mxu0 %v235
    %254 = vmatprep.subr.mxu0 0.0
    %255 = vmatpush1.msra.mxu0 %v236
    %256 = vmatprep.subr.mxu0 0.0
    %257 = vmatpush1.msra.mxu0 %v237
    %258 = vmatprep.subr.mxu0 0.0
    %259 = vmatpush1.msra.mxu0 %v238
    %260 = vmatprep.subr.mxu0 0.0
    %261 = vmatpush1.msra.mxu0 %v239
    %262 = vmatprep.subr.mxu0 0.0
    %263 = vmatpush1.msra.mxu0 %v240
    %264 = vmatprep.subr.mxu0 0.0
    %265 = vmatpush1.msra.mxu0 0.0
    %266 = vmatprep.subr.mxu0 0.0
    %267 = vmatpush1.msra.mxu0 0.0
    %268 = vmatprep.subr.mxu0 0.0
    %269 = vmatpush1.msra.mxu0 0.0
    %270 = vmatprep.subr.mxu0 0.0
    %271 = vmatpush1.msra.mxu0 0.0
    %272 = vmatprep.subr.mxu0 0.0
    %273 = vmatpush1.msra.mxu0 0.0
    %274 = vmatprep.subr.mxu0 0.0
    %275 = vmatpush1.msra.mxu0 0.0
    %276 = vmatprep.subr.mxu0 0.0
    %277 = vmatpush1.msra.mxu0 0.0
    %278 = vmatprep.subr.mxu0 0.0
    %279 = vmatpush1.msra.mxu0 0.0
    %280 = vmatprep.subr.mxu0 0.0
    %281 = vmatpush1.msra.mxu0 0.0
    %282 = vmatprep.subr.mxu0 0.0
    %283 = vmatpush1.msra.mxu0 0.0
    %284 = vmatprep.subr.mxu0 0.0
    %285 = vmatpush1.msra.mxu0 0.0
    %286 = vmatprep.subr.mxu0 0.0
    %287 = vmatpush1.msra.mxu0 0.0
    %288 = vmatprep.subr.mxu0 0.0
    %289 = vmatpush1.msra.mxu0 0.0
    %290 = vmatprep.subr.mxu0 0.0
    %291 = vmatpush1.msra.mxu0 0.0
    %292 = vmatprep.subr.mxu0 0.0
    %293 = vmatpush1.msra.mxu0 0.0
    %294 = vmatprep.subr.mxu0 0.0
    %295 = vmatpush1.msra.mxu0 0.0
    %296 = vmatprep.subr.mxu0 0.0
    %297 = vmatpush1.msra.mxu0 0.0
    %298 = vmatprep.subr.mxu0 0.0
    %299 = vmatpush1.msra.mxu0 0.0
    %300 = vmatprep.subr.mxu0 0.0
    %301 = vmatpush1.msra.mxu0 0.0
    %302 = vmatprep.subr.mxu0 0.0
    %303 = vmatpush1.msra.mxu0 0.0
    %304 = vmatprep.subr.mxu0 0.0
    %305 = vmatpush1.msra.mxu0 0.0
    %306 = vmatprep.subr.mxu0 0.0
    %307 = vmatpush1.msra.mxu0 0.0
    %308 = vmatprep.subr.mxu0 0.0
    %309 = vmatpush1.msra.mxu0 0.0
    %310 = vmatprep.subr.mxu0 0.0
    %311 = vmatpush1.msra.mxu0 0.0
    %312 = vmatprep.mubr.f32.mxu0 0.0
    %313 = vmatmul.mubr.f32.gmra.mrb[0].mxu0 %v243
    %v314 = vpop.f32.mrb[0].mxu0
    %v315 = vadd.f32 0.0, %v314
    %v316 = vpop.f32.mrb[0].mxu0
    %317 = vmatprep.mubr.f32.mxu0 0.0
    %318 = vmatmul.mubr.f32.gmra.mrb[0].mxu0 %v246
    %v319 = vpop.f32.mrb[0].mxu0
    %v320 = vadd.f32 0.0, %v319
    %v321 = vpop.f32.mrb[0].mxu0
    %322 = vdwg.mxu0
    %v323 = vadd.f32 %v231, %v315
    %v324 = vadd.f32 %v232, %v320
    %325 = vst.msk [vmem:[#allocation2] sm:$0xff] %vm47, %v323
    %326 = vst.msk [vmem:[#allocation2 + $0x8] sm:$0xff] %vm47, %v324
    // Predicated region
    $region34: #{feed_forward.1} parent=1 // pred_check
      %p327 = pneg %p27
    $region35: #{feed_forward.1} parent=1 // pred_check_branch
      %329 = sbr.rel (%p327) target = $region37
    $region36: #{feed_forward.1} parent=1 // pred_region
      %v330 = vld [vmem:[#allocation2] sm:$0xff]
      %v331 = vld [vmem:[#allocation2 + $0x8] sm:$0xff]
      %v332 = vld [vmem:[%s6] sm:$0x1]
      %v334 = vlaneseq
      %v335 = vshrl.u32 %v334, 7
      %v336 = vsub.s32 0, %v335
      %v337 = vrot.slane %v332, %v336
      %v339 = vadd.f32 %v330, %v337
      %v340 = vadd.f32 %v331, %v337
      %341 = vst.msk [vmem:[#allocation3] sm:$0xff] %vm47, %v339
      %342 = vst.msk [vmem:[#allocation3 + $0x8] sm:$0xff] %vm47, %v340
    $region37: #{feed_forward.1} parent=1 // pred_fallthru
      _
    // Predicated region
    $region38: #{feed_forward.1} parent=1 // pred_check
      _
    $region39: #{feed_forward.1} parent=1 // pred_check_branch
      %344 = sbr.rel (0) target = $region41
    $region40: #{feed_forward.1} parent=1 // pred_region
      %s346 = ssub.s32 256, 256
      %347 = vsyncadd [#allocation4], %s346
      %s348 = sshll.u32 [#allocation3], 4
      %s349 = int_to_ptr.vmem [resolvable:$true] %s348
      %354 = dma.vmem_to_hbm [thread:$0]  %s349, 256, %s7, [#allocation4], 128, 128, 8
    $region41: #{feed_forward.1} parent=1 // pred_fallthru
      _
    // Predicated region
    $region42: #{feed_forward.1} parent=1 // pred_check
      _
    $region43: #{feed_forward.1} parent=1 // pred_check_branch
      %356 = sbr.rel (0) target = $region45
    $region44: #{feed_forward.1} parent=1 // pred_region
      %357 = dma.done [#allocation4], 256
    $region45: #{feed_forward.1} parent=1 // pred_fallthru
      _
    %358 = vsyncpa [#allocation4], 1

</llo_original>
